<compile_context>
chip_gen: v7x
topology: tpu7x:2x2x1
jax: 0.10.0
libtpu: 0.0.40
codegen_flags: <defaults>
</compile_context>

<pallas_src>
import numpy as np
import jax
import jax.numpy as jnp
from jax.experimental import pallas as pl
from jax.experimental.pallas import tpu as pltpu

_VMEM_BUDGET = 40 * 1024 * 1024   # conservative working-set budget (all gens)


def _smoothing_matrix(L, kernel_size, stride):
    """(out_len, L) integer *count* matrix C with out = (C @ x) / kernel_size.

    Encodes replicate padding by (kernel_size-1)//2 rows on each side followed
    by AvgPool1d(kernel_size, stride, padding=0) along the sequence axis --
    exactly the PyTorch moving_avg.forward, which is linear in x.  Counts
    (rather than 1/k weights) are stored so the matrix is exact even in bf16.
    """
    p = (kernel_size - 1) // 2
    padded_len = L + 2 * p
    out_len = (padded_len - kernel_size) // stride + 1
    C = np.zeros((out_len, L), dtype=np.float32)
    for i in range(out_len):
        for j in range(i * stride, i * stride + kernel_size):
            src = min(max(j - p, 0), L - 1)      # replicate pad == clamped index
            C[i, src] += 1.0
    return C, out_len


def _make_kernel(inv_k):
    def kernel(s_ref, x_ref, o_ref):
        # One MXU matmul per (batch, lane-tile): (out_len, L) @ (L, TILE_D),
        # f32 accumulation, single f32 scale by 1/kernel_size, one final cast.
        acc = jnp.dot(s_ref[...], x_ref[...], preferred_element_type=jnp.float32)
        o_ref[...] = (acc * inv_k).astype(o_ref.dtype)
    return kernel


def _choose_tile_d(B, D, L, out_len, itemsize, s_bytes):
    """Largest lane tile fitting the VMEM budget; split further only if tiles
    stay >= 512 lanes and the grid gets >= 4 steps (v7x megacore overlap)."""
    if D % 128 != 0:
        return D                      # full-D block is always legal (== array dim)
    per_lane = 2 * (L + out_len) * itemsize        # double-buffered x + out tiles
    avail = _VMEM_BUDGET - 2 * s_bytes
    if avail < 128 * per_lane:
        max_lanes = 128
    else:
        max_lanes = (avail // per_lane) // 128 * 128
    units = D // 128
    divisors = sorted((g for g in range(1, units + 1) if units % g == 0),
                      reverse=True)
    tile_units = next((g for g in divisors if g * 128 <= max_lanes), 1)
    if B * (units // tile_units) < 4:
        cands = [g for g in divisors
                 if 512 <= g * 128 <= max_lanes and B * (units // g) >= 4]
        if cands:
            tile_units = max(cands)
    return tile_units * 128


def moving_avg(x, kernel_size, stride=1):
    """Pallas TPU forward of the PyTorch `moving_avg` module.

    x: (B, L, D); averaged along axis 1 with replicate padding of
    (kernel_size-1)//2 rows each side, window `kernel_size`, given `stride`.
    Returns (B, out_len, D) in x.dtype.
    """
    B, L, D = x.shape
    C_np, out_len = _smoothing_matrix(L, kernel_size, stride)
    dtype = x.dtype
    itemsize = dtype.itemsize
    S = jnp.asarray(C_np, dtype=dtype)             # integer counts: exact in bf16
    s_bytes = out_len * L * itemsize

    tile_d = _choose_tile_d(B, D, L, out_len, itemsize, s_bytes)
    grid_d = D // tile_d

    needed = 2 * s_bytes + 2 * tile_d * (L + out_len) * itemsize
    vmem_limit = int(min(max(needed + (8 << 20), 32 << 20), 48 << 20))

    return pl.pallas_call(
        _make_kernel(1.0 / kernel_size),
        out_shape=jax.ShapeDtypeStruct((B, out_len, D), dtype),
        grid_spec=pltpu.PrefetchScalarGridSpec(
            num_scalar_prefetch=0,
            grid=(B, grid_d),
            in_specs=[
                # Count matrix: constant index_map -> resident in VMEM all grid long.
                pl.BlockSpec((out_len, L), lambda b, d: (0, 0)),
                # One batch row, one lane tile of x (no wrapper-side reshape/pad).
                pl.BlockSpec((pl.Squeezed(), L, tile_d), lambda b, d: (b, 0, d)),
            ],
            out_specs=pl.BlockSpec((pl.Squeezed(), out_len, tile_d),
                                   lambda b, d: (b, 0, d)),
        ),
        compiler_params=pltpu.CompilerParams(
            dimension_semantics=("parallel", "parallel"),
            vmem_limit_bytes=vmem_limit,
        ),
    )(S, x)


# ----------------------------------------------------------------------------
# Pure-JAX reference mirroring the PyTorch forward exactly (for verification).
# ----------------------------------------------------------------------------
def _moving_avg_ref(x, kernel_size, stride=1):
    p = (kernel_size - 1) // 2
    front = jnp.repeat(x[:, 0:1, :], p, axis=1)
    end = jnp.repeat(x[:, -1:, :], p, axis=1)
    xp = jnp.concatenate([front, x, end], axis=1)            # (B, L + 2p, D)
    out_len = (xp.shape[1] - kernel_size) // stride + 1
    rows = [xp[:, i * stride:i * stride + kernel_size, :].mean(axis=1)
            for i in range(out_len)]
    return jnp.stack(rows, axis=1)                            # (B, out_len, D)


if __name__ == "__main__":
    key = jax.random.PRNGKey(0)

    # Small deterministic example in the module's (batch, seq_len, features) layout.
    B, L, D = 2, 32, 256
    x = jax.random.normal(key, (B, L, D), dtype=jnp.float32)

    # Typical decomposition kernel (25, stride 1), a small odd kernel, a strided case.
    for kernel_size, stride in [(25, 1), (5, 1), (4, 2)]:
        out = jax.block_until_ready(moving_avg(x, kernel_size, stride))
        ref = _moving_avg_ref(x, kernel_size, stride)
        assert out.shape == ref.shape, (out.shape, ref.shape)
        assert out.dtype == x.dtype
        err = float(jnp.max(jnp.abs(out.astype(jnp.float32) - ref)))
        assert err < 2e-5, (kernel_size, stride, err)

    # bf16 path: native dtype preserved end-to-end, f32 accumulation inside.
    xb = x.astype(jnp.bfloat16)
    outb = jax.block_until_ready(moving_avg(xb, 25, 1))
    refb = _moving_avg_ref(xb.astype(jnp.float32), 25, 1)
    assert outb.dtype == jnp.bfloat16
    errb = float(jnp.max(jnp.abs(outb.astype(jnp.float32) - refb)))
    assert errb < 3e-2, errb

    # Small / non-multiple-of-128 feature dim exercises the full-D block branch.
    x_small = jax.random.normal(jax.random.PRNGKey(0), (3, 24, 7), dtype=jnp.float32)
    out_s = jax.block_until_ready(moving_avg(x_small, 7, 1))
    ref_s = _moving_avg_ref(x_small, 7, 1)
    err_s = float(jnp.max(jnp.abs(out_s - ref_s)))
    assert out_s.shape == ref_s.shape and err_s < 2e-5, (out_s.shape, err_s)

    print("KERNEL_OK")
</pallas_src>

<mosaic_0001>
module attributes {stable_mosaic.version = 11 : i64} {
  func.func @kernel(%arg0: i32, %arg1: i32, %arg2: memref<32x32xf32, #tpu.memory_space<vmem>>, %arg3: memref<1x32x256xf32, #tpu.memory_space<vmem>>, %arg4: memref<1x32x256xf32, #tpu.memory_space<vmem>>) attributes {dimension_semantics = [#tpu.dimension_semantics<parallel>, #tpu.dimension_semantics<parallel>], iteration_bounds = array<i64: 2, 1>, scalar_prefetch = 0 : i64, scratch_operands = 0 : i64, tpu.core_type = #tpu.core_type<tc>, window_params = [{pipeline_mode = #tpu.pipeline_mode<synchronous>, transform_indices = @transform_0, window_bounds = array<i64: 32, 32>}, {transform_indices = @transform_1, window_bounds = array<i64: 1, 32, 256>}, {transform_indices = @transform_2, window_bounds = array<i64: 1, 32, 256>}]} {
    %c0 = arith.constant 0 : index
    %c0_0 = arith.constant 0 : index
    %0 = vector.load %arg2[%c0, %c0_0] : memref<32x32xf32, #tpu.memory_space<vmem>>, vector<32x32xf32>
    %c0_1 = arith.constant 0 : index
    %c0_2 = arith.constant 0 : index
    %c0_3 = arith.constant 0 : index
    %1 = vector.load %arg3[%c0_1, %c0_2, %c0_3] : memref<1x32x256xf32, #tpu.memory_space<vmem>>, vector<1x32x256xf32>
    %2 = vector.shape_cast %1 : vector<1x32x256xf32> to vector<32x256xf32>
    %cst = arith.constant dense<0.000000e+00> : vector<32x256xf32>
    %3 = tpu.matmul %0, %2, %cst {dimension_numbers = #tpu.dot_dimension_numbers<[1], [0], [0], [1], [0, 0, 1, 1], [], []>} : vector<32x32xf32>, vector<32x256xf32>, vector<32x256xf32> -> vector<32x256xf32>
    %cst_4 = arith.constant 4.000000e-02 : f32
    %4 = vector.broadcast %cst_4 : f32 to vector<32x256xf32>
    %5 = arith.mulf %3, %4 : vector<32x256xf32>
    %c0_5 = arith.constant 0 : index
    %c0_6 = arith.constant 0 : index
    %c0_7 = arith.constant 0 : index
    %6 = vector.load %arg4[%c0_5, %c0_6, %c0_7] : memref<1x32x256xf32, #tpu.memory_space<vmem>>, vector<1x32x256xf32>
    %7 = vector.shape_cast %6 : vector<1x32x256xf32> to vector<32x256xf32>
    %8 = vector.shape_cast %5 : vector<32x256xf32> to vector<1x32x256xf32>
    tpu.vector_store %arg4[%c0_5, %c0_6, %c0_7], %8 {strides = array<i32>} : memref<1x32x256xf32, #tpu.memory_space<vmem>>, vector<1x32x256xf32>,
    return
  }
  func.func @transform_0(%arg0: i32, %arg1: i32) -> (i32, i32) {
    %c0_i32 = arith.constant 0 : i32
    %c0_i32_0 = arith.constant 0 : i32
    %c0_i32_1 = arith.constant 0 : i32
    return %c0_i32, %c0_i32_0 : i32, i32
  }
  func.func @transform_1(%arg0: i32, %arg1: i32) -> (i32, i32, i32) {
    %c0_i32 = arith.constant 0 : i32
    %c0_i32_0 = arith.constant 0 : i32
    return %arg0, %c0_i32, %arg1 : i32, i32, i32
  }
  func.func @transform_2(%arg0: i32, %arg1: i32) -> (i32, i32, i32) {
    %c0_i32 = arith.constant 0 : i32
    %c0_i32_0 = arith.constant 0 : i32
    return %arg0, %c0_i32, %arg1 : i32, i32, i32
  }
}

</mosaic_0001>

<llo_original>
// kernel: tpu_custom_call.1
$region0: #{tpu_custom_call.1}
  #allocation0 [shape = 'u32[]', space=smem, size = 0x4, offset = 0x4, fixed_abs, tag = 'smem constant byte address 0x4 - core index']
  #allocation1 [shape = 'u32[144,128]{1,0:T(1,128)}', space=vmem, size = 0x12000, scoped, tag = 'internal scratch']
  %s0 = inlined_call_operand.hbm [shape: f32[32,32], index: 0, kind: input, shape index: {}]
  %s1 = inlined_call_operand.hbm [shape: f32[2,32,256], index: 1, kind: input, shape index: {}]
  %s2 = inlined_call_operand.hbm [shape: f32[2,32,256], index: 2, kind: output, shape index: {}]
  %s3 = sld [smem:[#allocation0]]
  $region49: #{tpu_custom_call.1} parent=0
    _
  %s5 = ssub.s32 1, %s3
  %s6 = scalar_select 0, %s5, %s3
  $region1: #{tpu_custom_call.1} parent=0
    #allocation2 [shape = 'u8[16384]{0}', space=vmem, size = 0x4000, scoped, tag = 'input window, operand 0, single buffered']
    #allocation3 [shape = 's32[2]{0}', space=sflag, size = 0x8, scoped, tag = 'scoped memory for tpu_custom_call.1']
    #allocation4 [shape = 's32[2]{0}', space=sflag, size = 0x8, scoped, tag = 'scoped memory for tpu_custom_call.1']
    #allocation5 [shape = 'u8[65536]{0}', space=vmem, size = 0x10000, scoped, tag = 'input window, operand 1']
    #allocation6 [shape = 's32[2]{0}', space=sflag, size = 0x8, scoped, tag = 'scoped memory for tpu_custom_call.1']
    #allocation7 [shape = 'u8[65536]{0}', space=vmem, size = 0x10000, scoped, tag = 'output window, operand 0']
    %7 = vsyncpa [#allocation3], 0
    %8 = vsyncpa [#allocation6], 0
    %s9 = scalar_lea.sflag [#allocation6], 1
    %10 = vsyncpa %s9, 0
    %11 = vsyncpa [#allocation4], 0
    %s12 = scalar_lea.sflag [#allocation4], 1
    %13 = vsyncpa %s12, 0
    loop: start=0, step=1, limit=4
    $region2: #{tpu_custom_call.1} parent=1 // loop_pre_header
      _
    $region3: #{tpu_custom_call.1} parent=1 // loop_header
      %s15 = sphi 0, %s19
      %p16 = scmp.ge.s32.totalorder %s15, 4
      %s22 = sphi 0, %s34
      %s23 = sphi 0, %s30
      %s24 = sphi 0, %s22
      %s25 = sphi 0, %s23
      %s26 = sphi 0, %s24
      %s27 = sphi 0, %s25
      %s35 = sphi 0, %s35
      %s37 = sphi 0, %s35
      %s38 = sphi 0, %s37
      %s52 = sphi 0, %s38
      %s60 = sphi 0, %s62
      %s63 = sphi 0, %s60
      %s64 = sphi 0, %s63
      %s80 = sphi 0, %s64
      %s88 = sphi 0, %s90
      %s91 = sphi 0, %s88
      %s92 = sphi 0, %s91
      %s108 = sphi 0, %s92
    $region4: #{tpu_custom_call.1} parent=1 // loop_header_branch
      %18 = sbr.rel (%p16) target = $region8
    $region5: #{tpu_custom_call.1} parent=1 // loop_body
      %s20 = ssub.s32 %s15, 1
      %s21 = ssub.s32 %s15, 2
      %s28 = sadd.s32 1, %s23
      %p29 = scmp.ge.s32.totalorder %s28, 1
      %s30 = scalar_select %p29, 0, %s28
      %s31 = sadd.s32 1, %s22
      %s32 = scalar_select %p29, %s31, %s22
      %p33 = scmp.ge.s32.totalorder %s32, 2
      %s34 = scalar_select %p33, 0, %s32
      %s36 = sadd.s32 %s35, 1
      %p39 = scmp.eq.s32.totalorder %s15, 1
      %p40 = scmp.ne.s32.totalorder %s35, %s37
      %p41 = scmp.eq.s32.totalorder %s15, 0
      %p42 = por %p40, %p41
      %p43 = scmp.ne.s32.totalorder %s35, %s37
      %p44 = scmp.eq.s32.totalorder %s20, 1
      %p45 = por %p43, %p44
      %p46 = scmp.ne.s32.totalorder %s37, %s38
      %p47 = scmp.eq.s32.totalorder %s20, 0
      %p48 = por %p46, %p47
      %p49 = scmp.ne.s32.totalorder %s37, %s38
      %p50 = scmp.eq.s32.totalorder %s21, 1
      %p51 = por %p49, %p50
      %p53 = scmp.ne.s32.totalorder %s38, %s52
      %p54 = scmp.eq.s32.totalorder %s21, 0
      %p55 = por %p53, %p54
      %s56 = ssub.s32 %s22, %s34
      %s57 = ssub.s32 %s23, %s30
      %s58 = sor.u32 %s56, %s57
      %p59 = scmp.eq.s32.totalorder %s58, 0
      %s61 = sadd.s32 %s60, 1
      %s62 = scalar_select %p59, %s60, %s61
      %p65 = pneg %p59
      %p66 = scmp.eq.s32.totalorder %s15, 1
      %p67 = por %p65, %p66
      %p68 = scmp.ne.s32.totalorder %s60, %s63
      %p69 = scmp.eq.s32.totalorder %s15, 0
      %p70 = por %p68, %p69
      %p71 = scmp.ne.s32.totalorder %s60, %s63
      %p72 = scmp.eq.s32.totalorder %s20, 1
      %p73 = por %p71, %p72
      %p74 = scmp.ne.s32.totalorder %s63, %s64
      %p75 = scmp.eq.s32.totalorder %s20, 0
      %p76 = por %p74, %p75
      %p77 = scmp.ne.s32.totalorder %s63, %s64
      %p78 = scmp.eq.s32.totalorder %s21, 1
      %p79 = por %p77, %p78
      %p81 = scmp.ne.s32.totalorder %s64, %s80
      %p82 = scmp.eq.s32.totalorder %s21, 0
      %p83 = por %p81, %p82
      %s84 = ssub.s32 %s22, %s34
      %s85 = ssub.s32 %s23, %s30
      %s86 = sor.u32 %s84, %s85
      %p87 = scmp.eq.s32.totalorder %s86, 0
      %s89 = sadd.s32 %s88, 1
      %s90 = scalar_select %p87, %s88, %s89
      %p93 = pneg %p87
      %p94 = scmp.eq.s32.totalorder %s15, 1
      %p95 = por %p93, %p94
      %p96 = scmp.ne.s32.totalorder %s88, %s91
      %p97 = scmp.eq.s32.totalorder %s15, 0
      %p98 = por %p96, %p97
      %p99 = scmp.ne.s32.totalorder %s88, %s91
      %p100 = scmp.eq.s32.totalorder %s20, 1
      %p101 = por %p99, %p100
      %p102 = scmp.ne.s32.totalorder %s91, %s92
      %p103 = scmp.eq.s32.totalorder %s20, 0
      %p104 = por %p102, %p103
      %p105 = scmp.ne.s32.totalorder %s91, %s92
      %p106 = scmp.eq.s32.totalorder %s21, 1
      %p107 = por %p105, %p106
      %p109 = scmp.ne.s32.totalorder %s92, %s108
      %p110 = scmp.eq.s32.totalorder %s21, 0
      %p111 = por %p109, %p110
      %p112 = scmp.le.s32.totalorder 1, %s15
      %p113 = scmp.lt.s32.totalorder %s15, 3
      %p114 = pnand %p112, %p113
      %p115 = pneg %p114
      // Predicated region
      $region9: #{tpu_custom_call.1} parent=5 // pred_check
        _
      $region10: #{tpu_custom_call.1} parent=5 // pred_check_branch
        %117 = sbr.rel (%p114) target = $region12
      $region11: #{tpu_custom_call.1} parent=5 // pred_region
        %s118 = ssub.s32 %s15, 1
        // Predicated region
        $region13: #{tpu_custom_call.1} parent=11 // pred_check
          %p119 = pneg %p48
        $region14: #{tpu_custom_call.1} parent=11 // pred_check_branch
          %121 = sbr.rel (%p119) target = $region16
        $region15: #{tpu_custom_call.1} parent=11 // pred_region
          %s123 = ssub.s32 512, 512
          %124 = vsyncadd [#allocation3], %s123
          %s125 = sshll.u32 [#allocation2], 4
          %s126 = int_to_ptr.vmem [resolvable:$true] %s125
          %131 = dma.hbm_to_vmem [thread:$0]  %s0, 512, %s126, [#allocation3], 128, 128, 8
        $region16: #{tpu_custom_call.1} parent=11 // pred_fallthru
          _
      $region12: #{tpu_custom_call.1} parent=5 // pred_fallthru
        _
      %p132 = scmp.lt.s32.totalorder %s15, 2
      // Predicated region
      $region17: #{tpu_custom_call.1} parent=5 // pred_check
        %p133 = pneg %p132
      $region18: #{tpu_custom_call.1} parent=5 // pred_check_branch
        %135 = sbr.rel (%p133) target = $region20
      $region19: #{tpu_custom_call.1} parent=5 // pred_region
        // Predicated region
        $region21: #{tpu_custom_call.1} parent=19 // pred_check
          %p136 = pneg %p70
        $region22: #{tpu_custom_call.1} parent=19 // pred_check_branch
          %138 = sbr.rel (%p136) target = $region24
        $region23: #{tpu_custom_call.1} parent=19 // pred_region
          %s139 = sand.u32 %s60, 1
          %s140 = scalar_lea.sflag [#allocation6], %s139
          %s141 = sand.u32 %s60, 1
          %s142 = smul.addr %s141, 64
          %s143 = scalar_lea.vmem [#allocation5], %s142
          %s144 = smul.u32 2, %s23
          %s146 = ssub.s32 1024, 1024
          %147 = vsyncadd %s140, %s146
          %s148 = smul.addr %s22, 8
          %s149 = sadd.s32 %s144, %s148
          %s150 = smul.addr %s149, 128
          %s151 = scalar_lea.hbm %s1, %s150
          %s152 = sshll.u32 %s143, 4
          %s153 = int_to_ptr.vmem [resolvable:$true] %s152
          %158 = dma.hbm_to_vmem [thread:$0]  %s151, 1024, %s153, %s140, 256, 256, 16
        $region24: #{tpu_custom_call.1} parent=19 // pred_fallthru
          _
      $region20: #{tpu_custom_call.1} parent=5 // pred_fallthru
        _
      %p159 = scmp.le.s32.totalorder 1, %s15
      %p160 = scmp.lt.s32.totalorder %s15, 3
      %p161 = pnand %p159, %p160
      %p162 = pneg %p161
      // Predicated region
      $region25: #{tpu_custom_call.1} parent=5 // pred_check
        _
      $region26: #{tpu_custom_call.1} parent=5 // pred_check_branch
        %164 = sbr.rel (%p161) target = $region28
      $region27: #{tpu_custom_call.1} parent=5 // pred_region
        %s165 = ssub.s32 %s15, 1
        // Predicated region
        $region29: #{tpu_custom_call.1} parent=27 // pred_check
          %p166 = pneg %p48
        $region30: #{tpu_custom_call.1} parent=27 // pred_check_branch
          %168 = sbr.rel (%p166) target = $region32
        $region31: #{tpu_custom_call.1} parent=27 // pred_region
          %169 = dma.done [#allocation3], 512
        $region32: #{tpu_custom_call.1} parent=27 // pred_fallthru
          _
        %s170 = sand.u32 %s63, 1
        %s171 = scalar_lea.sflag [#allocation6], %s170
        %s172 = sand.u32 %s63, 1
        %s173 = smul.addr %s172, 64
        %s174 = scalar_lea.vmem [#allocation5], %s173
        // Predicated region
        $region33: #{tpu_custom_call.1} parent=27 // pred_check
          %p175 = pneg %p76
        $region34: #{tpu_custom_call.1} parent=27 // pred_check_branch
          %177 = sbr.rel (%p175) target = $region36
        $region35: #{tpu_custom_call.1} parent=27 // pred_region
          %178 = dma.done %s171, 1024
        $region36: #{tpu_custom_call.1} parent=27 // pred_fallthru
          _
        %p179 = pneg %p48
        %p180 = pneg %p45
        %s181 = sand.u32 %s63, 1
        %s182 = scalar_lea.sflag [#allocation6], %s181
        %s183 = sand.u32 %s63, 1
        %s184 = smul.addr %s183, 64
        %s185 = scalar_lea.vmem [#allocation5], %s184
        %p186 = pneg %p76
        %p187 = pneg %p73
        %p188 = pneg %p104
        %p189 = pneg %p101
        %s190 = sand.u32 %s91, 1
        %s191 = scalar_lea.sflag [#allocation4], %s190
        %s192 = sand.u32 %s91, 1
        %s193 = smul.addr %s192, 64
        %s194 = scalar_lea.vmem [#allocation7], %s193
        %s195 = smul.u32 2, %s25
        %s196 = smul.u32 2, %s25
        %v197 = vld [vmem:[#allocation2] sm:$0xff]
        %v198 = vld [vmem:[#allocation2 + $0x8] sm:$0xff]
        %v199 = vld [vmem:[#allocation2 + $0x10] sm:$0xff]
        %v200 = vld [vmem:[#allocation2 + $0x18] sm:$0xff]
        %v201 = vld [vmem:[%s174] sm:$0xff]
        %v202 = vld [vmem:[%s174 + $0x8] sm:$0xff]
        %v203 = vld [vmem:[%s174 + $0x10] sm:$0xff]
        %v204 = vld [vmem:[%s174 + $0x18] sm:$0xff]
        %v205 = vld [vmem:[%s174 + $0x20] sm:$0xff]
        %v206 = vld [vmem:[%s174 + $0x28] sm:$0xff]
        %v207 = vld [vmem:[%s174 + $0x30] sm:$0xff]
        %v208 = vld [vmem:[%s174 + $0x38] sm:$0xff]
        %vm209 = vcmask 261120
        %v211 = vsel %vm209, %v197, 0
        %v214 = vsel %vm209, %v198, 0
        %v217 = vsel %vm209, %v199, 0
        %v220 = vsel %vm209, %v200, 0
        %222 = vmatprep.subr.mxu0 %v202
        %223 = vmatpush1.msra.mxu0 %v201
        %224 = vmatprep.subr.mxu0 %v204
        %225 = vmatpush1.msra.mxu0 %v203
        %226 = vmatprep.subr.mxu0 %v206
        %227 = vmatpush1.msra.mxu0 %v205
        %228 = vmatprep.subr.mxu0 %v208
        %229 = vmatpush1.msra.mxu0 %v207
        %230 = vmatprep.subr.mxu0 0.0
        %231 = vmatpush1.msra.mxu0 0.0
        %232 = vmatprep.subr.mxu0 0.0
        %233 = vmatpush1.msra.mxu0 0.0
        %234 = vmatprep.subr.mxu0 0.0
        %235 = vmatpush1.msra.mxu0 0.0
        %236 = vmatprep.subr.mxu0 0.0
        %237 = vmatpush1.msra.mxu0 0.0
        %238 = vmatprep.subr.mxu0 0.0
        %239 = vmatpush1.msra.mxu0 0.0
        %240 = vmatprep.subr.mxu0 0.0
        %241 = vmatpush1.msra.mxu0 0.0
        %242 = vmatprep.subr.mxu0 0.0
        %243 = vmatpush1.msra.mxu0 0.0
        %244 = vmatprep.subr.mxu0 0.0
        %245 = vmatpush1.msra.mxu0 0.0
        %246 = vmatprep.subr.mxu0 0.0
        %247 = vmatpush1.msra.mxu0 0.0
        %248 = vmatprep.subr.mxu0 0.0
        %249 = vmatpush1.msra.mxu0 0.0
        %250 = vmatprep.subr.mxu0 0.0
        %251 = vmatpush1.msra.mxu0 0.0
        %252 = vmatprep.subr.mxu0 0.0
        %253 = vmatpush1.msra.mxu0 0.0
        %254 = vmatprep.subr.mxu0 0.0
        %255 = vmatpush1.msra.mxu0 0.0
        %256 = vmatprep.subr.mxu0 0.0
        %257 = vmatpush1.msra.mxu0 0.0
        %258 = vmatprep.subr.mxu0 0.0
        %259 = vmatpush1.msra.mxu0 0.0
        %260 = vmatprep.subr.mxu0 0.0
        %261 = vmatpush1.msra.mxu0 0.0
        %262 = vmatprep.subr.mxu0 0.0
        %263 = vmatpush1.msra.mxu0 0.0
        %264 = vmatprep.subr.mxu0 0.0
        %265 = vmatpush1.msra.mxu0 0.0
        %266 = vmatprep.subr.mxu0 0.0
        %267 = vmatpush1.msra.mxu0 0.0
        %268 = vmatprep.subr.mxu0 0.0
        %269 = vmatpush1.msra.mxu0 0.0
        %270 = vmatprep.subr.mxu0 0.0
        %271 = vmatpush1.msra.mxu0 0.0
        %272 = vmatprep.subr.mxu0 0.0
        %273 = vmatpush1.msra.mxu0 0.0
        %274 = vmatprep.subr.mxu0 0.0
        %275 = vmatpush1.msra.mxu0 0.0
        %276 = vmatprep.subr.mxu0 0.0
        %277 = vmatpush1.msra.mxu0 0.0
        %278 = vmatprep.subr.mxu0 0.0
        %279 = vmatpush1.msra.mxu0 0.0
        %280 = vmatprep.subr.mxu0 0.0
        %281 = vmatpush1.msra.mxu0 0.0
        %282 = vmatprep.subr.mxu0 0.0
        %283 = vmatpush1.msra.mxu0 0.0
        %284 = vmatprep.subr.mxu0 0.0
        %285 = vmatpush1.msra.mxu0 0.0
        %286 = vmatprep.mubr.f32.mxu0 0.0
        %287 = vmatmul.mubr.f32.gmra.mrb[0].mxu0 %v211
        %v288 = vpop.f32.mrb[0].mxu0
        %v289 = vadd.f32 0.0, %v288
        %v290 = vpop.f32.mrb[0].mxu0
        %v291 = vadd.f32 0.0, %v290
        %292 = vmatprep.mubr.f32.mxu0 0.0
        %293 = vmatmul.mubr.f32.gmra.mrb[0].mxu0 %v214
        %v294 = vpop.f32.mrb[0].mxu0
        %v295 = vadd.f32 0.0, %v294
        %v296 = vpop.f32.mrb[0].mxu0
        %v297 = vadd.f32 0.0, %v296
        %298 = vmatprep.mubr.f32.mxu0 0.0
        %299 = vmatmul.mubr.f32.gmra.mrb[0].mxu0 %v217
        %v300 = vpop.f32.mrb[0].mxu0
        %v301 = vadd.f32 0.0, %v300
        %v302 = vpop.f32.mrb[0].mxu0
        %v303 = vadd.f32 0.0, %v302
        %304 = vmatprep.mubr.f32.mxu0 0.0
        %305 = vmatmul.mubr.f32.gmra.mrb[0].mxu0 %v220
        %v306 = vpop.f32.mrb[0].mxu0
        %v307 = vadd.f32 0.0, %v306
        %v308 = vpop.f32.mrb[0].mxu0
        %v309 = vadd.f32 0.0, %v308
        %310 = vdwg.mxu0
        %v311 = vmul.f32 %v289, 0.04
        %v312 = vmul.f32 %v291, 0.04
        %v313 = vmul.f32 %v295, 0.04
        %v314 = vmul.f32 %v297, 0.04
        %v315 = vmul.f32 %v301, 0.04
        %v316 = vmul.f32 %v303, 0.04
        %v317 = vmul.f32 %v307, 0.04
        %v318 = vmul.f32 %v309, 0.04
        %319 = vst [vmem:[%s194] sm:$0xff] %v311
        %320 = vst [vmem:[%s194 + $0x8] sm:$0xff] %v312
        %321 = vst [vmem:[%s194 + $0x10] sm:$0xff] %v313
        %322 = vst [vmem:[%s194 + $0x18] sm:$0xff] %v314
        %323 = vst [vmem:[%s194 + $0x20] sm:$0xff] %v315
        %324 = vst [vmem:[%s194 + $0x28] sm:$0xff] %v316
        %325 = vst [vmem:[%s194 + $0x30] sm:$0xff] %v317
        %326 = vst [vmem:[%s194 + $0x38] sm:$0xff] %v318
        %s327 = sand.u32 %s91, 1
        %s328 = scalar_lea.sflag [#allocation4], %s327
        %s329 = sand.u32 %s91, 1
        %s330 = smul.addr %s329, 64
        %s331 = scalar_lea.vmem [#allocation7], %s330
        // Predicated region
        $region37: #{tpu_custom_call.1} parent=27 // pred_check
          %p332 = pneg %p101
        $region38: #{tpu_custom_call.1} parent=27 // pred_check_branch
          %334 = sbr.rel (%p332) target = $region40
        $region39: #{tpu_custom_call.1} parent=27 // pred_region
          %s335 = smul.u32 2, %s25
          %s337 = ssub.s32 1024, 1024
          %338 = vsyncadd %s328, %s337
          %s339 = smul.addr %s24, 8
          %s340 = sadd.s32 %s335, %s339
          %s341 = smul.addr %s340, 128
          %s342 = scalar_lea.hbm %s2, %s341
          %s343 = sshll.u32 %s331, 4
          %s344 = int_to_ptr.vmem [resolvable:$true] %s343
          %349 = dma.vmem_to_hbm [thread:$0]  %s344, 1024, %s342, %s328, 256, 256, 16
        $region40: #{tpu_custom_call.1} parent=27 // pred_fallthru
          _
      $region28: #{tpu_custom_call.1} parent=5 // pred_fallthru
        _
      %p350 = scmp.le.s32.totalorder 2, %s15
      // Predicated region
      $region41: #{tpu_custom_call.1} parent=5 // pred_check
        %p351 = pneg %p350
      $region42: #{tpu_custom_call.1} parent=5 // pred_check_branch
        %353 = sbr.rel (%p351) target = $region44
      $region43: #{tpu_custom_call.1} parent=5 // pred_region
        %s354 = ssub.s32 %s15, 2
        // Predicated region
        $region45: #{tpu_custom_call.1} parent=43 // pred_check
          %p355 = pneg %p107
        $region46: #{tpu_custom_call.1} parent=43 // pred_check_branch
          %357 = sbr.rel (%p355) target = $region48
        $region47: #{tpu_custom_call.1} parent=43 // pred_region
          %s358 = sand.u32 %s92, 1
          %s359 = scalar_lea.sflag [#allocation4], %s358
          %s360 = sand.u32 %s92, 1
          %s361 = smul.addr %s360, 64
          %s362 = scalar_lea.vmem [#allocation7], %s361
          %363 = dma.done %s359, 1024
        $region48: #{tpu_custom_call.1} parent=43 // pred_fallthru
          _
      $region44: #{tpu_custom_call.1} parent=5 // pred_fallthru
        _
    $region6: #{tpu_custom_call.1} parent=1 // loop_footer
      %s19 = sadd.s32 1, %s15
    $region7: #{tpu_custom_call.1} parent=1 // loop_footer_branch
      %14 = sbr.rel target = $region3
    $region8: #{tpu_custom_call.1} parent=1 // loop_exit
      _
    %364 = vsyncpa [#allocation3], 1
    %s365 = scalar_lea.sflag [#allocation3], 1
    %366 = vsyncpa %s365, 1
    %367 = vsyncpa [#allocation6], 1
    %s368 = scalar_lea.sflag [#allocation6], 1
    %369 = vsyncpa %s368, 1
    %370 = vsyncpa [#allocation4], 1
    %s371 = scalar_lea.sflag [#allocation4], 1
    %372 = vsyncpa %s371, 1

</llo_original>
